<compile_context>
chip_gen: v6e
topology: v6e:2x2x1
jax: 0.10.0
libtpu: 0.0.40
codegen_flags: <defaults>
</compile_context>

<pallas_src>
import jax
import jax.numpy as jnp
from jax.experimental import pallas as pl
from jax.experimental.pallas import tpu as pltpu


def _dqn_mlp_kernel(x_ref,
                    w1_ref, b1_ref,
                    w2_ref, b2_ref,
                    w3_ref, b3_ref,
                    w4_ref, b4_ref,
                    o_ref):
    """4-layer MLP on one (TB, in_dim) batch tile; weights resident in VMEM.

    x arrives f32 and is cast to bf16 in-kernel; matmuls accumulate in f32 on
    the MXU; bias-add, ReLU and the final store stay f32.
    """
    x = x_ref[...].astype(jnp.bfloat16)

    h = jnp.dot(x, w1_ref[...],
                preferred_element_type=jnp.float32) + b1_ref[...]
    h = jnp.maximum(h, 0.0)

    h = jnp.dot(h.astype(jnp.bfloat16), w2_ref[...],
                preferred_element_type=jnp.float32) + b2_ref[...]
    h = jnp.maximum(h, 0.0)

    h = jnp.dot(h.astype(jnp.bfloat16), w3_ref[...],
                preferred_element_type=jnp.float32) + b3_ref[...]
    h = jnp.maximum(h, 0.0)

    out = jnp.dot(h.astype(jnp.bfloat16), w4_ref[...],
                  preferred_element_type=jnp.float32) + b4_ref[...]
    o_ref[...] = out.astype(o_ref.dtype)


def prepare_params(params):
    """One-time conversion of PyTorch-layout params to kernel layout.

    PyTorch Linear stores W as (out, in) f32; the kernel wants (in, out) bf16
    weights and (1, out) f32 bias rows.  Call this once and reuse the result
    for every forward call.
    """
    prep = {}
    for i in range(1, 5):
        prep[f"w{i}"] = jnp.asarray(params[f"w{i}"]).T.astype(jnp.bfloat16)
        prep[f"b{i}"] = jnp.asarray(params[f"b{i}"]).reshape(1, -1).astype(jnp.float32)
    return prep


def _batch_map(i):
    return (i, 0)


def _const_map(i):
    return (0, 0)


def improved_dqn_forward(x, kparams, *, tile_b=1024):
    """x: (B, input_dim) float32.  kparams: output of prepare_params()."""
    B, in_dim = x.shape
    w1, b1 = kparams["w1"], kparams["b1"]
    w2, b2 = kparams["w2"], kparams["b2"]
    w3, b3 = kparams["w3"], kparams["b3"]
    w4, b4 = kparams["w4"], kparams["b4"]
    out_dim = w4.shape[1]

    # ---- Batch tile selection ------------------------------------------------
    # Multiple of 16, capped at 4096 (keeps f32 intermediates well under the
    # 32 MiB scoped-VMEM default even on v7x with its 64 MiB physical VMEM).
    align = 16
    tile_b = max(align, min(int(tile_b), 4096))
    tile_b = (tile_b // align) * align

    if B > tile_b:
        tb = tile_b                                   # many tiles (>=2 steps)
    elif B >= 256:
        # Split into >=2 grid steps so the "parallel" axis can shard across
        # both v7x TensorCores; the tile still stays >=128 rows.
        tb = pl.cdiv(pl.cdiv(B, 2), align) * align
    else:
        tb = B                                        # single exact tile
    grid = (pl.cdiv(B, tb),)

    # No padding: the last block may overhang (OOB reads are garbage on rows
    # that are never returned; OOB output writes are masked).
    in_specs = [
        pl.BlockSpec((tb, in_dim), _batch_map),       # x: tiled over batch
        pl.BlockSpec(w1.shape, _const_map),           # weights/biases: resident
        pl.BlockSpec(b1.shape, _const_map),
        pl.BlockSpec(w2.shape, _const_map),
        pl.BlockSpec(b2.shape, _const_map),
        pl.BlockSpec(w3.shape, _const_map),
        pl.BlockSpec(b3.shape, _const_map),
        pl.BlockSpec(w4.shape, _const_map),
        pl.BlockSpec(b4.shape, _const_map),
    ]
    out_specs = pl.BlockSpec((tb, out_dim), _batch_map)

    # Advisory cost estimate for XLA scheduling around the custom call.
    flops = 2 * B * (in_dim * 128 + 128 * 256 + 256 * 128 + 128 * out_dim)
    weight_bytes = sum(int(a.size) * a.dtype.itemsize
                       for a in (w1, w2, w3, w4, b1, b2, b3, b4))
    bytes_accessed = B * in_dim * 4 + B * out_dim * 4 + weight_bytes
    cost = pl.CostEstimate(flops=flops, transcendentals=0,
                           bytes_accessed=bytes_accessed)

    return pl.pallas_call(
        _dqn_mlp_kernel,
        out_shape=jax.ShapeDtypeStruct((B, out_dim), jnp.float32),
        grid=grid,
        in_specs=in_specs,
        out_specs=out_specs,
        compiler_params=pltpu.CompilerParams(
            dimension_semantics=("parallel",)),
        cost_estimate=cost,
    )(x, w1, b1, w2, b2, w3, b3, w4, b4)


def init_params(key, input_dim, output_dim):
    """Deterministic init mirroring PyTorch Linear default (uniform ±1/sqrt(fan_in))."""
    dims = [(128, input_dim), (256, 128), (128, 256), (output_dim, 128)]
    params = {}
    for i, (fan_out, fan_in) in enumerate(dims, start=1):
        key, kw, kb = jax.random.split(key, 3)
        bound = 1.0 / (fan_in ** 0.5)
        params[f"w{i}"] = jax.random.uniform(
            kw, (fan_out, fan_in), jnp.float32, -bound, bound)
        params[f"b{i}"] = jax.random.uniform(
            kb, (fan_out,), jnp.float32, -bound, bound)
    return params


def reference_forward(x, params):
    """Pure-JAX f32 reference matching PyTorch semantics exactly."""
    h = x
    for i in range(1, 4):
        h = jnp.maximum(h @ params[f"w{i}"].T + params[f"b{i}"], 0.0)
    return h @ params["w4"].T + params["b4"]


if __name__ == "__main__":
    key = jax.random.PRNGKey(0)
    batch, input_dim, output_dim = 8, 16, 8

    k_x, k_p, k_x2 = jax.random.split(key, 3)
    x = jax.random.normal(k_x, (batch, input_dim), jnp.float32)
    params = init_params(k_p, input_dim, output_dim)
    kparams = prepare_params(params)   # one-time weight transpose / bf16 cast

    # Small batch (single exact tile).
    out = jax.block_until_ready(improved_dqn_forward(x, kparams))
    ref = reference_forward(x, params)
    assert out.shape == (batch, output_dim)
    assert jnp.allclose(out, ref, atol=5e-2, rtol=5e-2), "mismatch vs reference (small batch)"

    # Larger, non-multiple batch: exercises the 2-step parallel grid and the
    # un-padded ragged last tile (OOB rows masked on write, never returned).
    x_big = jax.random.normal(k_x2, (600, input_dim), jnp.float32)
    out_big = jax.block_until_ready(improved_dqn_forward(x_big, kparams))
    ref_big = reference_forward(x_big, params)
    assert out_big.shape == (600, output_dim)
    assert jnp.allclose(out_big, ref_big, atol=5e-2, rtol=5e-2), "mismatch vs reference (tiled batch)"

    print("KERNEL_OK")
</pallas_src>

<mosaic_0001>
module attributes {stable_mosaic.version = 11 : i64} {
  func.func @_dqn_mlp_kernel(%arg0: i32, %arg1: memref<8x16xf32, #tpu.memory_space<vmem>>, %arg2: memref<16x128xbf16, #tpu.memory_space<vmem>>, %arg3: memref<1x128xf32, #tpu.memory_space<vmem>>, %arg4: memref<128x256xbf16, #tpu.memory_space<vmem>>, %arg5: memref<1x256xf32, #tpu.memory_space<vmem>>, %arg6: memref<256x128xbf16, #tpu.memory_space<vmem>>, %arg7: memref<1x128xf32, #tpu.memory_space<vmem>>, %arg8: memref<128x8xbf16, #tpu.memory_space<vmem>>, %arg9: memref<1x8xf32, #tpu.memory_space<vmem>>, %arg10: memref<8x8xf32, #tpu.memory_space<vmem>>) attributes {dimension_semantics = [#tpu.dimension_semantics<parallel>], iteration_bounds = array<i64: 1>, scalar_prefetch = 0 : i64, scratch_operands = 0 : i64, tpu.core_type = #tpu.core_type<tc>, window_params = [{transform_indices = @transform_0, window_bounds = array<i64: 8, 16>}, {pipeline_mode = #tpu.pipeline_mode<synchronous>, transform_indices = @transform_1, window_bounds = array<i64: 16, 128>}, {pipeline_mode = #tpu.pipeline_mode<synchronous>, transform_indices = @transform_2, window_bounds = array<i64: 1, 128>}, {pipeline_mode = #tpu.pipeline_mode<synchronous>, transform_indices = @transform_3, window_bounds = array<i64: 128, 256>}, {pipeline_mode = #tpu.pipeline_mode<synchronous>, transform_indices = @transform_4, window_bounds = array<i64: 1, 256>}, {pipeline_mode = #tpu.pipeline_mode<synchronous>, transform_indices = @transform_5, window_bounds = array<i64: 256, 128>}, {pipeline_mode = #tpu.pipeline_mode<synchronous>, transform_indices = @transform_6, window_bounds = array<i64: 1, 128>}, {pipeline_mode = #tpu.pipeline_mode<synchronous>, transform_indices = @transform_7, window_bounds = array<i64: 128, 8>}, {pipeline_mode = #tpu.pipeline_mode<synchronous>, transform_indices = @transform_8, window_bounds = array<i64: 1, 8>}, {transform_indices = @transform_9, window_bounds = array<i64: 8, 8>}]} {
    %c0 = arith.constant 0 : index
    %c0_0 = arith.constant 0 : index
    %0 = vector.load %arg1[%c0, %c0_0] : memref<8x16xf32, #tpu.memory_space<vmem>>, vector<8x16xf32>
    %1 = arith.truncf %0 : vector<8x16xf32> to vector<8x16xbf16>
    %c0_1 = arith.constant 0 : index
    %c0_2 = arith.constant 0 : index
    %2 = vector.load %arg2[%c0_1, %c0_2] : memref<16x128xbf16, #tpu.memory_space<vmem>>, vector<16x128xbf16>
    %cst = arith.constant dense<0.000000e+00> : vector<8x128xf32>
    %3 = tpu.matmul %1, %2, %cst {dimension_numbers = #tpu.dot_dimension_numbers<[1], [0], [0], [1], [0, 0, 1, 1], [], []>} : vector<8x16xbf16>, vector<16x128xbf16>, vector<8x128xf32> -> vector<8x128xf32>
    %c0_3 = arith.constant 0 : index
    %c0_4 = arith.constant 0 : index
    %4 = vector.load %arg3[%c0_3, %c0_4] : memref<1x128xf32, #tpu.memory_space<vmem>>, vector<1x128xf32>
    %5 = vector.broadcast %4 : vector<1x128xf32> to vector<8x128xf32>
    %6 = arith.addf %3, %5 : vector<8x128xf32>
    %cst_5 = arith.constant 0.000000e+00 : f32
    %7 = vector.broadcast %cst_5 : f32 to vector<8x128xf32>
    %8 = arith.maximumf %6, %7 : vector<8x128xf32>
    %9 = arith.truncf %8 : vector<8x128xf32> to vector<8x128xbf16>
    %c0_6 = arith.constant 0 : index
    %c0_7 = arith.constant 0 : index
    %10 = vector.load %arg4[%c0_6, %c0_7] : memref<128x256xbf16, #tpu.memory_space<vmem>>, vector<128x256xbf16>
    %cst_8 = arith.constant dense<0.000000e+00> : vector<8x256xf32>
    %11 = tpu.matmul %9, %10, %cst_8 {dimension_numbers = #tpu.dot_dimension_numbers<[1], [0], [0], [1], [0, 0, 1, 1], [], []>} : vector<8x128xbf16>, vector<128x256xbf16>, vector<8x256xf32> -> vector<8x256xf32>
    %c0_9 = arith.constant 0 : index
    %c0_10 = arith.constant 0 : index
    %12 = vector.load %arg5[%c0_9, %c0_10] : memref<1x256xf32, #tpu.memory_space<vmem>>, vector<1x256xf32>
    %13 = vector.broadcast %12 : vector<1x256xf32> to vector<8x256xf32>
    %14 = arith.addf %11, %13 : vector<8x256xf32>
    %cst_11 = arith.constant 0.000000e+00 : f32
    %15 = vector.broadcast %cst_11 : f32 to vector<8x256xf32>
    %16 = arith.maximumf %14, %15 : vector<8x256xf32>
    %17 = arith.truncf %16 : vector<8x256xf32> to vector<8x256xbf16>
    %c0_12 = arith.constant 0 : index
    %c0_13 = arith.constant 0 : index
    %18 = vector.load %arg6[%c0_12, %c0_13] : memref<256x128xbf16, #tpu.memory_space<vmem>>, vector<256x128xbf16>
    %cst_14 = arith.constant dense<0.000000e+00> : vector<8x128xf32>
    %19 = tpu.matmul %17, %18, %cst_14 {dimension_numbers = #tpu.dot_dimension_numbers<[1], [0], [0], [1], [0, 0, 1, 1], [], []>} : vector<8x256xbf16>, vector<256x128xbf16>, vector<8x128xf32> -> vector<8x128xf32>
    %c0_15 = arith.constant 0 : index
    %c0_16 = arith.constant 0 : index
    %20 = vector.load %arg7[%c0_15, %c0_16] : memref<1x128xf32, #tpu.memory_space<vmem>>, vector<1x128xf32>
    %21 = vector.broadcast %20 : vector<1x128xf32> to vector<8x128xf32>
    %22 = arith.addf %19, %21 : vector<8x128xf32>
    %cst_17 = arith.constant 0.000000e+00 : f32
    %23 = vector.broadcast %cst_17 : f32 to vector<8x128xf32>
    %24 = arith.maximumf %22, %23 : vector<8x128xf32>
    %25 = arith.truncf %24 : vector<8x128xf32> to vector<8x128xbf16>
    %c0_18 = arith.constant 0 : index
    %c0_19 = arith.constant 0 : index
    %26 = vector.load %arg8[%c0_18, %c0_19] : memref<128x8xbf16, #tpu.memory_space<vmem>>, vector<128x8xbf16>
    %cst_20 = arith.constant dense<0.000000e+00> : vector<8x8xf32>
    %27 = tpu.matmul %25, %26, %cst_20 {dimension_numbers = #tpu.dot_dimension_numbers<[1], [0], [0], [1], [0, 0, 1, 1], [], []>} : vector<8x128xbf16>, vector<128x8xbf16>, vector<8x8xf32> -> vector<8x8xf32>
    %c0_21 = arith.constant 0 : index
    %c0_22 = arith.constant 0 : index
    %28 = vector.load %arg9[%c0_21, %c0_22] : memref<1x8xf32, #tpu.memory_space<vmem>>, vector<1x8xf32>
    %29 = vector.broadcast %28 : vector<1x8xf32> to vector<8x8xf32>
    %30 = arith.addf %27, %29 : vector<8x8xf32>
    %c0_23 = arith.constant 0 : index
    %c0_24 = arith.constant 0 : index
    %31 = vector.load %arg10[%c0_23, %c0_24] : memref<8x8xf32, #tpu.memory_space<vmem>>, vector<8x8xf32>
    tpu.vector_store %arg10[%c0_23, %c0_24], %30 {strides = array<i32>} : memref<8x8xf32, #tpu.memory_space<vmem>>, vector<8x8xf32>,
    return
  }
  func.func @transform_0(%arg0: i32) -> (i32, i32) {
    %c0_i32 = arith.constant 0 : i32
    %c0_i32_0 = arith.constant 0 : i32
    return %arg0, %c0_i32 : i32, i32
  }
  func.func @transform_1(%arg0: i32) -> (i32, i32) {
    %c0_i32 = arith.constant 0 : i32
    %c0_i32_0 = arith.constant 0 : i32
    %c0_i32_1 = arith.constant 0 : i32
    return %c0_i32, %c0_i32_0 : i32, i32
  }
  func.func @transform_2(%arg0: i32) -> (i32, i32) {
    %c0_i32 = arith.constant 0 : i32
    %c0_i32_0 = arith.constant 0 : i32
    %c0_i32_1 = arith.constant 0 : i32
    return %c0_i32, %c0_i32_0 : i32, i32
  }
  func.func @transform_3(%arg0: i32) -> (i32, i32) {
    %c0_i32 = arith.constant 0 : i32
    %c0_i32_0 = arith.constant 0 : i32
    %c0_i32_1 = arith.constant 0 : i32
    return %c0_i32, %c0_i32_0 : i32, i32
  }
  func.func @transform_4(%arg0: i32) -> (i32, i32) {
    %c0_i32 = arith.constant 0 : i32
    %c0_i32_0 = arith.constant 0 : i32
    %c0_i32_1 = arith.constant 0 : i32
    return %c0_i32, %c0_i32_0 : i32, i32
  }
  func.func @transform_5(%arg0: i32) -> (i32, i32) {
    %c0_i32 = arith.constant 0 : i32
    %c0_i32_0 = arith.constant 0 : i32
    %c0_i32_1 = arith.constant 0 : i32
    return %c0_i32, %c0_i32_0 : i32, i32
  }
  func.func @transform_6(%arg0: i32) -> (i32, i32) {
    %c0_i32 = arith.constant 0 : i32
    %c0_i32_0 = arith.constant 0 : i32
    %c0_i32_1 = arith.constant 0 : i32
    return %c0_i32, %c0_i32_0 : i32, i32
  }
  func.func @transform_7(%arg0: i32) -> (i32, i32) {
    %c0_i32 = arith.constant 0 : i32
    %c0_i32_0 = arith.constant 0 : i32
    %c0_i32_1 = arith.constant 0 : i32
    return %c0_i32, %c0_i32_0 : i32, i32
  }
  func.func @transform_8(%arg0: i32) -> (i32, i32) {
    %c0_i32 = arith.constant 0 : i32
    %c0_i32_0 = arith.constant 0 : i32
    %c0_i32_1 = arith.constant 0 : i32
    return %c0_i32, %c0_i32_0 : i32, i32
  }
  func.func @transform_9(%arg0: i32) -> (i32, i32) {
    %c0_i32 = arith.constant 0 : i32
    %c0_i32_0 = arith.constant 0 : i32
    return %arg0, %c0_i32 : i32, i32
  }
}

</mosaic_0001>

<llo_original>
// kernel: tpu_custom_call.1
$region0: #{tpu_custom_call.1}
  #allocation0 [shape = 'u32[]', space=smem, size = 0x4, offset = 0x4, fixed_abs, tag = 'smem constant byte address 0x4 - core index']
  #allocation1 [shape = 'u32[144,128]{1,0:T(1,128)}', space=vmem, size = 0x12000, scoped, tag = 'internal scratch']
  %s0 = inlined_call_operand.vmem [shape: f32[8,16], index: 0, kind: input, shape index: {}]
  %s1 = inlined_call_operand.vmem [shape: bf16[16,128], index: 1, kind: input, shape index: {}]
  %s2 = inlined_call_operand.vmem [shape: f32[1,128], index: 2, kind: input, shape index: {}]
  %s3 = inlined_call_operand.hbm [shape: bf16[128,256], index: 3, kind: input, shape index: {}]
  %s4 = inlined_call_operand.vmem [shape: f32[1,256], index: 4, kind: input, shape index: {}]
  %s5 = inlined_call_operand.hbm [shape: bf16[256,128], index: 5, kind: input, shape index: {}]
  %s6 = inlined_call_operand.vmem [shape: f32[1,128], index: 6, kind: input, shape index: {}]
  %s7 = inlined_call_operand.vmem [shape: bf16[128,8], index: 7, kind: input, shape index: {}]
  %s8 = inlined_call_operand.vmem [shape: f32[1,8], index: 8, kind: input, shape index: {}]
  %s9 = inlined_call_operand.hbm [shape: f32[8,8], index: 9, kind: output, shape index: {}]
  %s10 = sld [smem:[#allocation0]]
  $region54: #{tpu_custom_call.1} parent=0
    _
  %s12 = ssub.s32 1, %s10
  %s13 = scalar_select 0, %s12, %s10
  $region1: #{tpu_custom_call.1} parent=0
    #allocation2 [shape = 'u8[65536]{0}', space=vmem, size = 0x10000, scoped, tag = 'input window, operand 3, single buffered']
    #allocation3 [shape = 's32[1]{0}', space=sflag, size = 0x4, scoped, tag = 'scoped memory for tpu_custom_call.1']
    #allocation4 [shape = 's32[1]{0}', space=sflag, size = 0x4, scoped, tag = 'scoped memory for tpu_custom_call.1']
    #allocation5 [shape = 'u8[65536]{0}', space=vmem, size = 0x10000, scoped, tag = 'input window, operand 5, single buffered']
    #allocation6 [shape = 's32[1]{0}', space=sflag, size = 0x4, scoped, tag = 'scoped memory for tpu_custom_call.1']
    #allocation7 [shape = 'u8[4096]{0}', space=vmem, size = 0x1000, scoped, tag = 'output window, operand 0, single buffered']
    %14 = vsyncpa [#allocation3], 0
    %15 = vsyncpa [#allocation6], 0
    %16 = vsyncpa [#allocation4], 0
    // Predicated region
    $region2: #{tpu_custom_call.1} parent=1 // pred_check
      _
    $region3: #{tpu_custom_call.1} parent=1 // pred_check_branch
      %18 = sbr.rel (0) target = $region5
    $region4: #{tpu_custom_call.1} parent=1 // pred_region
      _
    $region5: #{tpu_custom_call.1} parent=1 // pred_fallthru
      _
    // Predicated region
    $region6: #{tpu_custom_call.1} parent=1 // pred_check
      _
    $region7: #{tpu_custom_call.1} parent=1 // pred_check_branch
      %20 = sbr.rel (0) target = $region9
    $region8: #{tpu_custom_call.1} parent=1 // pred_region
      _
    $region9: #{tpu_custom_call.1} parent=1 // pred_fallthru
      _
    // Predicated region
    $region10: #{tpu_custom_call.1} parent=1 // pred_check
      _
    $region11: #{tpu_custom_call.1} parent=1 // pred_check_branch
      %22 = sbr.rel (0) target = $region13
    $region12: #{tpu_custom_call.1} parent=1 // pred_region
      _
    $region13: #{tpu_custom_call.1} parent=1 // pred_fallthru
      _
    // Predicated region
    $region14: #{tpu_custom_call.1} parent=1 // pred_check
      _
    $region15: #{tpu_custom_call.1} parent=1 // pred_check_branch
      %24 = sbr.rel (0) target = $region17
    $region16: #{tpu_custom_call.1} parent=1 // pred_region
      %s26 = ssub.s32 2048, 2048
      %27 = vsyncadd [#allocation3], %s26
      %s28 = sshll.u32 [#allocation2], 4
      %s29 = int_to_ptr.vmem [resolvable:$true] %s28
      %34 = dma.hbm_to_vmem [thread:$0]  %s3, 2048, %s29, [#allocation3], 128, 128, 8
    $region17: #{tpu_custom_call.1} parent=1 // pred_fallthru
      _
    // Predicated region
    $region18: #{tpu_custom_call.1} parent=1 // pred_check
      _
    $region19: #{tpu_custom_call.1} parent=1 // pred_check_branch
      %36 = sbr.rel (0) target = $region21
    $region20: #{tpu_custom_call.1} parent=1 // pred_region
      _
    $region21: #{tpu_custom_call.1} parent=1 // pred_fallthru
      _
    // Predicated region
    $region22: #{tpu_custom_call.1} parent=1 // pred_check
      _
    $region23: #{tpu_custom_call.1} parent=1 // pred_check_branch
      %38 = sbr.rel (0) target = $region25
    $region24: #{tpu_custom_call.1} parent=1 // pred_region
      %s40 = ssub.s32 2048, 2048
      %41 = vsyncadd [#allocation6], %s40
      %s42 = sshll.u32 [#allocation5], 4
      %s43 = int_to_ptr.vmem [resolvable:$true] %s42
      %48 = dma.hbm_to_vmem [thread:$0]  %s5, 2048, %s43, [#allocation6], 64, 64, 4
    $region25: #{tpu_custom_call.1} parent=1 // pred_fallthru
      _
    // Predicated region
    $region26: #{tpu_custom_call.1} parent=1 // pred_check
      _
    $region27: #{tpu_custom_call.1} parent=1 // pred_check_branch
      %50 = sbr.rel (0) target = $region29
    $region28: #{tpu_custom_call.1} parent=1 // pred_region
      _
    $region29: #{tpu_custom_call.1} parent=1 // pred_fallthru
      _
    // Predicated region
    $region30: #{tpu_custom_call.1} parent=1 // pred_check
      _
    $region31: #{tpu_custom_call.1} parent=1 // pred_check_branch
      %52 = sbr.rel (0) target = $region33
    $region32: #{tpu_custom_call.1} parent=1 // pred_region
      _
    $region33: #{tpu_custom_call.1} parent=1 // pred_fallthru
      _
    // Predicated region
    $region34: #{tpu_custom_call.1} parent=1 // pred_check
      _
    $region35: #{tpu_custom_call.1} parent=1 // pred_check_branch
      %54 = sbr.rel (0) target = $region37
    $region36: #{tpu_custom_call.1} parent=1 // pred_region
      _
    $region37: #{tpu_custom_call.1} parent=1 // pred_fallthru
      _
    // Predicated region
    $region38: #{tpu_custom_call.1} parent=1 // pred_check
      _
    $region39: #{tpu_custom_call.1} parent=1 // pred_check_branch
      %56 = sbr.rel (0) target = $region41
    $region40: #{tpu_custom_call.1} parent=1 // pred_region
      %57 = dma.done [#allocation3], 2048
    $region41: #{tpu_custom_call.1} parent=1 // pred_fallthru
      _
    // Predicated region
    $region42: #{tpu_custom_call.1} parent=1 // pred_check
      _
    $region43: #{tpu_custom_call.1} parent=1 // pred_check_branch
      %59 = sbr.rel (0) target = $region45
    $region44: #{tpu_custom_call.1} parent=1 // pred_region
      %60 = dma.done [#allocation6], 2048
    $region45: #{tpu_custom_call.1} parent=1 // pred_fallthru
      _
    %v62 = vld [vmem:[%s0] sm:$0xff]
    %v63 = vpack.c.bf16 %v62, %v62
    %v64 = vld [vmem:[%s1] sm:$0xf]
    %v65 = vld [vmem:[%s1 + $0x4] sm:$0xf]
    %v66 = vld [vmem:[%s2] sm:$0x1]
    %v68 = vlaneseq
    %v69 = vshrl.u32 %v68, 7
    %v70 = vsub.s32 0, %v69
    %v71 = vrot.slane %v66, %v70
    %v75 = vunpack.c.l.b16 %v64
    %v76 = vunpack.c.l.b16 %v65
    %v77 = vpack.c.b16 %v76, %v75
    %vm79 = vcmask 130048
    %v81 = vsel %vm79, %v63, 0
    %83 = vmatprep.subr.bf16.mxu0 0
    %84 = vmatpush1.bf16.msra.mxu0 0
    %85 = vmatprep.subr.bf16.mxu0 0
    %86 = vmatpush1.bf16.msra.mxu0 0
    %87 = vmatprep.subr.bf16.mxu0 0
    %88 = vmatpush1.bf16.msra.mxu0 0
    %89 = vmatprep.subr.bf16.mxu0 0
    %90 = vmatpush1.bf16.msra.mxu0 0
    %91 = vmatprep.subr.bf16.mxu0 0
    %92 = vmatpush1.bf16.msra.mxu0 0
    %93 = vmatprep.subr.bf16.mxu0 0
    %94 = vmatpush1.bf16.msra.mxu0 0
    %95 = vmatprep.subr.bf16.mxu0 0
    %96 = vmatpush1.bf16.msra.mxu0 0
    %97 = vmatprep.subr.bf16.mxu0 0
    %98 = vmatpush1.bf16.msra.mxu0 %v77
    %99 = vmatprep.subr.bf16.mxu0 0
    %100 = vmatpush2.bf16.msra.mxu0 0
    %101 = vmatprep.subr.bf16.mxu0 0
    %102 = vmatpush2.bf16.msra.mxu0 0
    %103 = vmatprep.subr.bf16.mxu0 0
    %104 = vmatpush2.bf16.msra.mxu0 0
    %105 = vmatprep.subr.bf16.mxu0 0
    %106 = vmatpush2.bf16.msra.mxu0 0
    %107 = vmatprep.subr.bf16.mxu0 0
    %108 = vmatpush2.bf16.msra.mxu0 0
    %109 = vmatprep.subr.bf16.mxu0 0
    %110 = vmatpush2.bf16.msra.mxu0 0
    %111 = vmatprep.subr.bf16.mxu0 0
    %112 = vmatpush2.bf16.msra.mxu0 0
    %113 = vmatprep.subr.bf16.mxu0 0
    %114 = vmatpush2.bf16.msra.mxu0 0
    %115 = vmatprep.mubr.bf16.mxu0 0
    %116 = vmatmul.mubr.bf16.gmra.mxu0 %v81
    %v117 = vpop.f32.mrf.mxu0
    %v118 = vadd.f32 %v71, %v117
    %v119 = vpop.f32.mrf.mxu0
    %v120 = vpop.f32.mrf.mxu0
    %v121 = vpop.f32.mrf.mxu0
    %122 = vdwg.mxu0
    %v123 = vmax.f32 %v118, 0.0
    %v124 = vpack.c.bf16 %v123, %v123
    %v125 = vld [vmem:[#allocation2] sm:$0xff]
    %v126 = vld [vmem:[#allocation2 + $0x8] sm:$0xff]
    %v127 = vld [vmem:[#allocation2 + $0x10] sm:$0xff]
    %v128 = vld [vmem:[#allocation2 + $0x18] sm:$0xff]
    %v129 = vld [vmem:[#allocation2 + $0x20] sm:$0xff]
    %v130 = vld [vmem:[#allocation2 + $0x28] sm:$0xff]
    %v131 = vld [vmem:[#allocation2 + $0x30] sm:$0xff]
    %v132 = vld [vmem:[#allocation2 + $0x38] sm:$0xff]
    %v133 = vld [vmem:[#allocation2 + $0x40] sm:$0xff]
    %v134 = vld [vmem:[#allocation2 + $0x48] sm:$0xff]
    %v135 = vld [vmem:[#allocation2 + $0x50] sm:$0xff]
    %v136 = vld [vmem:[#allocation2 + $0x58] sm:$0xff]
    %v137 = vld [vmem:[#allocation2 + $0x60] sm:$0xff]
    %v138 = vld [vmem:[#allocation2 + $0x68] sm:$0xff]
    %v139 = vld [vmem:[#allocation2 + $0x70] sm:$0xff]
    %v140 = vld [vmem:[#allocation2 + $0x78] sm:$0xff]
    %v141 = vld [vmem:[%s4] sm:$0x3]
    %v143 = vlaneseq
    %v144 = vshrl.u32 %v143, 7
    %v145 = vsub.s32 0, %v144
    %v146 = vrot.slane %v141, %v145
    %v147 = vlaneseq
    %v148 = vshrl.u32 %v147, 7
    %v149 = vsub.s32 1, %v148
    %v150 = vrot.slane %v141, %v149
    %v169 = vunpack.c.l.b16 %v125
    %v170 = vunpack.c.h.b16 %v125
    %v171 = vunpack.c.l.b16 %v126
    %v172 = vunpack.c.h.b16 %v126
    %v173 = vunpack.c.l.b16 %v127
    %v174 = vunpack.c.h.b16 %v127
    %v175 = vunpack.c.l.b16 %v128
    %v176 = vunpack.c.h.b16 %v128
    %v177 = vunpack.c.l.b16 %v129
    %v178 = vunpack.c.h.b16 %v129
    %v179 = vunpack.c.l.b16 %v130
    %v180 = vunpack.c.h.b16 %v130
    %v181 = vunpack.c.l.b16 %v131
    %v182 = vunpack.c.h.b16 %v131
    %v183 = vunpack.c.l.b16 %v132
    %v184 = vunpack.c.h.b16 %v132
    %v185 = vunpack.c.l.b16 %v133
    %v186 = vunpack.c.h.b16 %v133
    %v187 = vunpack.c.l.b16 %v134
    %v188 = vunpack.c.h.b16 %v134
    %v189 = vunpack.c.l.b16 %v135
    %v190 = vunpack.c.h.b16 %v135
    %v191 = vunpack.c.l.b16 %v136
    %v192 = vunpack.c.h.b16 %v136
    %v193 = vunpack.c.l.b16 %v137
    %v194 = vunpack.c.h.b16 %v137
    %v195 = vunpack.c.l.b16 %v138
    %v196 = vunpack.c.h.b16 %v138
    %v197 = vunpack.c.l.b16 %v139
    %v198 = vunpack.c.h.b16 %v139
    %v199 = vunpack.c.l.b16 %v140
    %v200 = vunpack.c.h.b16 %v140
    %v201 = vpack.c.b16 %v171, %v169
    %v202 = vpack.c.b16 %v172, %v170
    %v203 = vpack.c.b16 %v175, %v173
    %v204 = vpack.c.b16 %v176, %v174
    %v205 = vpack.c.b16 %v179, %v177
    %v206 = vpack.c.b16 %v180, %v178
    %v207 = vpack.c.b16 %v183, %v181
    %v208 = vpack.c.b16 %v184, %v182
    %v209 = vpack.c.b16 %v187, %v185
    %v210 = vpack.c.b16 %v188, %v186
    %v211 = vpack.c.b16 %v191, %v189
    %v212 = vpack.c.b16 %v192, %v190
    %v213 = vpack.c.b16 %v195, %v193
    %v214 = vpack.c.b16 %v196, %v194
    %v215 = vpack.c.b16 %v199, %v197
    %v216 = vpack.c.b16 %v200, %v198
    %233 = vmatprep.subr.bf16.mxu0 %v216
    %234 = vmatpush1.bf16.msra.mxu0 %v215
    %235 = vmatprep.subr.bf16.mxu0 %v214
    %236 = vmatpush1.bf16.msra.mxu0 %v213
    %237 = vmatprep.subr.bf16.mxu0 %v212
    %238 = vmatpush1.bf16.msra.mxu0 %v211
    %239 = vmatprep.subr.bf16.mxu0 %v210
    %240 = vmatpush1.bf16.msra.mxu0 %v209
    %241 = vmatprep.subr.bf16.mxu0 %v208
    %242 = vmatpush1.bf16.msra.mxu0 %v207
    %243 = vmatprep.subr.bf16.mxu0 %v206
    %244 = vmatpush1.bf16.msra.mxu0 %v205
    %245 = vmatprep.subr.bf16.mxu0 %v204
    %246 = vmatpush1.bf16.msra.mxu0 %v203
    %247 = vmatprep.subr.bf16.mxu0 %v202
    %248 = vmatpush1.bf16.msra.mxu0 %v201
    %249 = vmatprep.subr.bf16.mxu0 0
    %250 = vmatpush2.bf16.msra.mxu0 0
    %251 = vmatprep.subr.bf16.mxu0 0
    %252 = vmatpush2.bf16.msra.mxu0 0
    %253 = vmatprep.subr.bf16.mxu0 0
    %254 = vmatpush2.bf16.msra.mxu0 0
    %255 = vmatprep.subr.bf16.mxu0 0
    %256 = vmatpush2.bf16.msra.mxu0 0
    %257 = vmatprep.subr.bf16.mxu0 0
    %258 = vmatpush2.bf16.msra.mxu0 0
    %259 = vmatprep.subr.bf16.mxu0 0
    %260 = vmatpush2.bf16.msra.mxu0 0
    %261 = vmatprep.subr.bf16.mxu0 0
    %262 = vmatpush2.bf16.msra.mxu0 0
    %263 = vmatprep.subr.bf16.mxu0 0
    %264 = vmatpush2.bf16.msra.mxu0 0
    %265 = vmatprep.mubr.bf16.mxu0 0
    %266 = vmatmul.mubr.bf16.gmra.mxu0 %v124
    %v267 = vpop.f32.mrf.mxu0
    %v268 = vadd.f32 %v146, %v267
    %v269 = vpop.f32.mrf.mxu0
    %v270 = vadd.f32 %v150, %v269
    %v271 = vpop.f32.mrf.mxu0
    %v272 = vpop.f32.mrf.mxu0
    %273 = vdwg.mxu0
    %v274 = vmax.f32 %v268, 0.0
    %v275 = vmax.f32 %v270, 0.0
    %v276 = vpack.c.bf16 %v274, %v274
    %v277 = vpack.c.bf16 %v275, %v275
    %v278 = vld [vmem:[#allocation5] sm:$0xf]
    %v279 = vld [vmem:[#allocation5 + $0x4] sm:$0xf]
    %v280 = vld [vmem:[#allocation5 + $0x8] sm:$0xf]
    %v281 = vld [vmem:[#allocation5 + $0xc] sm:$0xf]
    %v282 = vld [vmem:[#allocation5 + $0x10] sm:$0xf]
    %v283 = vld [vmem:[#allocation5 + $0x14] sm:$0xf]
    %v284 = vld [vmem:[#allocation5 + $0x18] sm:$0xf]
    %v285 = vld [vmem:[#allocation5 + $0x1c] sm:$0xf]
    %v286 = vld [vmem:[#allocation5 + $0x20] sm:$0xf]
    %v287 = vld [vmem:[#allocation5 + $0x24] sm:$0xf]
    %v288 = vld [vmem:[#allocation5 + $0x28] sm:$0xf]
    %v289 = vld [vmem:[#allocation5 + $0x2c] sm:$0xf]
    %v290 = vld [vmem:[#allocation5 + $0x30] sm:$0xf]
    %v291 = vld [vmem:[#allocation5 + $0x34] sm:$0xf]
    %v292 = vld [vmem:[#allocation5 + $0x38] sm:$0xf]
    %v293 = vld [vmem:[#allocation5 + $0x3c] sm:$0xf]
    %v294 = vld [vmem:[#allocation5 + $0x40] sm:$0xf]
    %v295 = vld [vmem:[#allocation5 + $0x44] sm:$0xf]
    %v296 = vld [vmem:[#allocation5 + $0x48] sm:$0xf]
    %v297 = vld [vmem:[#allocation5 + $0x4c] sm:$0xf]
    %v298 = vld [vmem:[#allocation5 + $0x50] sm:$0xf]
    %v299 = vld [vmem:[#allocation5 + $0x54] sm:$0xf]
    %v300 = vld [vmem:[#allocation5 + $0x58] sm:$0xf]
    %v301 = vld [vmem:[#allocation5 + $0x5c] sm:$0xf]
    %v302 = vld [vmem:[#allocation5 + $0x60] sm:$0xf]
    %v303 = vld [vmem:[#allocation5 + $0x64] sm:$0xf]
    %v304 = vld [vmem:[#allocation5 + $0x68] sm:$0xf]
    %v305 = vld [vmem:[#allocation5 + $0x6c] sm:$0xf]
    %v306 = vld [vmem:[#allocation5 + $0x70] sm:$0xf]
    %v307 = vld [vmem:[#allocation5 + $0x74] sm:$0xf]
    %v308 = vld [vmem:[#allocation5 + $0x78] sm:$0xf]
    %v309 = vld [vmem:[#allocation5 + $0x7c] sm:$0xf]
    %v310 = vld [vmem:[%s6] sm:$0x1]
    %v312 = vlaneseq
    %v313 = vshrl.u32 %v312, 7
    %v314 = vsub.s32 0, %v313
    %v315 = vrot.slane %v310, %v314
    %v349 = vunpack.c.l.b16 %v278
    %v350 = vunpack.c.l.b16 %v279
    %v351 = vunpack.c.l.b16 %v280
    %v352 = vunpack.c.l.b16 %v281
    %v353 = vunpack.c.l.b16 %v282
    %v354 = vunpack.c.l.b16 %v283
    %v355 = vunpack.c.l.b16 %v284
    %v356 = vunpack.c.l.b16 %v285
    %v357 = vunpack.c.l.b16 %v286
    %v358 = vunpack.c.l.b16 %v287
    %v359 = vunpack.c.l.b16 %v288
    %v360 = vunpack.c.l.b16 %v289
    %v361 = vunpack.c.l.b16 %v290
    %v362 = vunpack.c.l.b16 %v291
    %v363 = vunpack.c.l.b16 %v292
    %v364 = vunpack.c.l.b16 %v293
    %v365 = vunpack.c.l.b16 %v294
    %v366 = vunpack.c.l.b16 %v295
    %v367 = vunpack.c.l.b16 %v296
    %v368 = vunpack.c.l.b16 %v297
    %v369 = vunpack.c.l.b16 %v298
    %v370 = vunpack.c.l.b16 %v299
    %v371 = vunpack.c.l.b16 %v300
    %v372 = vunpack.c.l.b16 %v301
    %v373 = vunpack.c.l.b16 %v302
    %v374 = vunpack.c.l.b16 %v303
    %v375 = vunpack.c.l.b16 %v304
    %v376 = vunpack.c.l.b16 %v305
    %v377 = vunpack.c.l.b16 %v306
    %v378 = vunpack.c.l.b16 %v307
    %v379 = vunpack.c.l.b16 %v308
    %v380 = vunpack.c.l.b16 %v309
    %v381 = vpack.c.b16 %v350, %v349
    %v382 = vpack.c.b16 %v352, %v351
    %v383 = vpack.c.b16 %v354, %v353
    %v384 = vpack.c.b16 %v356, %v355
    %v385 = vpack.c.b16 %v358, %v357
    %v386 = vpack.c.b16 %v360, %v359
    %v387 = vpack.c.b16 %v362, %v361
    %v388 = vpack.c.b16 %v364, %v363
    %v389 = vpack.c.b16 %v366, %v365
    %v390 = vpack.c.b16 %v368, %v367
    %v391 = vpack.c.b16 %v370, %v369
    %v392 = vpack.c.b16 %v372, %v371
    %v393 = vpack.c.b16 %v374, %v373
    %v394 = vpack.c.b16 %v376, %v375
    %v395 = vpack.c.b16 %v378, %v377
    %v396 = vpack.c.b16 %v380, %v379
    %413 = vmatprep.subr.bf16.mxu0 0
    %414 = vmatpush1.bf16.msra.mxu0 %v388
    %415 = vmatprep.subr.bf16.mxu0 0
    %416 = vmatpush1.bf16.msra.mxu0 %v387
    %417 = vmatprep.subr.bf16.mxu0 0
    %418 = vmatpush1.bf16.msra.mxu0 %v386
    %419 = vmatprep.subr.bf16.mxu0 0
    %420 = vmatpush1.bf16.msra.mxu0 %v385
    %421 = vmatprep.subr.bf16.mxu0 0
    %422 = vmatpush1.bf16.msra.mxu0 %v384
    %423 = vmatprep.subr.bf16.mxu0 0
    %424 = vmatpush1.bf16.msra.mxu0 %v383
    %425 = vmatprep.subr.bf16.mxu0 0
    %426 = vmatpush1.bf16.msra.mxu0 %v382
    %427 = vmatprep.subr.bf16.mxu0 0
    %428 = vmatpush1.bf16.msra.mxu0 %v381
    %429 = vmatprep.subr.bf16.mxu0 0
    %430 = vmatpush2.bf16.msra.mxu0 %v396
    %431 = vmatprep.subr.bf16.mxu0 0
    %432 = vmatpush2.bf16.msra.mxu0 %v395
    %433 = vmatprep.subr.bf16.mxu0 0
    %434 = vmatpush2.bf16.msra.mxu0 %v394
    %435 = vmatprep.subr.bf16.mxu0 0
    %436 = vmatpush2.bf16.msra.mxu0 %v393
    %437 = vmatprep.subr.bf16.mxu0 0
    %438 = vmatpush2.bf16.msra.mxu0 %v392
    %439 = vmatprep.subr.bf16.mxu0 0
    %440 = vmatpush2.bf16.msra.mxu0 %v391
    %441 = vmatprep.subr.bf16.mxu0 0
    %442 = vmatpush2.bf16.msra.mxu0 %v390
    %443 = vmatprep.subr.bf16.mxu0 0
    %444 = vmatpush2.bf16.msra.mxu0 %v389
    %445 = vmatprep.mubr.bf16.mxu0 %v277
    %446 = vmatmul.mubr.bf16.gmra.mxu0 %v276
    %v447 = vpop.f32.mrf.mxu0
    %v448 = vadd.f32 %v315, %v447
    %v449 = vpop.f32.mrf.mxu0
    %v450 = vpop.f32.mrf.mxu0
    %v451 = vpop.f32.mrf.mxu0
    %452 = vdwg.mxu0
    %v453 = vmax.f32 %v448, 0.0
    %v454 = vpack.c.bf16 %v453, %v453
    %v455 = vld [vmem:[%s7] sm:$0xf]
    %v456 = vld [vmem:[%s7 + $0x4] sm:$0xf]
    %v457 = vld [vmem:[%s7 + $0x8] sm:$0xf]
    %v458 = vld [vmem:[%s7 + $0xc] sm:$0xf]
    %v459 = vld [vmem:[%s7 + $0x10] sm:$0xf]
    %v460 = vld [vmem:[%s7 + $0x14] sm:$0xf]
    %v461 = vld [vmem:[%s7 + $0x18] sm:$0xf]
    %v462 = vld [vmem:[%s7 + $0x1c] sm:$0xf]
    %v463 = vld [vmem:[%s7 + $0x20] sm:$0xf]
    %v464 = vld [vmem:[%s7 + $0x24] sm:$0xf]
    %v465 = vld [vmem:[%s7 + $0x28] sm:$0xf]
    %v466 = vld [vmem:[%s7 + $0x2c] sm:$0xf]
    %v467 = vld [vmem:[%s7 + $0x30] sm:$0xf]
    %v468 = vld [vmem:[%s7 + $0x34] sm:$0xf]
    %v469 = vld [vmem:[%s7 + $0x38] sm:$0xf]
    %v470 = vld [vmem:[%s7 + $0x3c] sm:$0xf]
    %v471 = vld [vmem:[%s8] sm:$0x1]
    %v473 = vlaneseq
    %v474 = vshrl.u32 %v473, 7
    %v475 = vsub.s32 0, %v474
    %v476 = vrot.slane %v471, %v475
    %v494 = vunpack.c.l.b16 %v455
    %v495 = vunpack.c.l.b16 %v456
    %v496 = vunpack.c.l.b16 %v457
    %v497 = vunpack.c.l.b16 %v458
    %v498 = vunpack.c.l.b16 %v459
    %v499 = vunpack.c.l.b16 %v460
    %v500 = vunpack.c.l.b16 %v461
    %v501 = vunpack.c.l.b16 %v462
    %v502 = vunpack.c.l.b16 %v463
    %v503 = vunpack.c.l.b16 %v464
    %v504 = vunpack.c.l.b16 %v465
    %v505 = vunpack.c.l.b16 %v466
    %v506 = vunpack.c.l.b16 %v467
    %v507 = vunpack.c.l.b16 %v468
    %v508 = vunpack.c.l.b16 %v469
    %v509 = vunpack.c.l.b16 %v470
    %v510 = vpack.c.b16 %v495, %v494
    %v511 = vpack.c.b16 %v497, %v496
    %v512 = vpack.c.b16 %v499, %v498
    %v513 = vpack.c.b16 %v501, %v500
    %v514 = vpack.c.b16 %v503, %v502
    %v515 = vpack.c.b16 %v505, %v504
    %v516 = vpack.c.b16 %v507, %v506
    %v517 = vpack.c.b16 %v509, %v508
    %526 = vmatprep.subr.bf16.mxu0 0
    %527 = vmatpush1.bf16.msra.mxu0 %v517
    %528 = vmatprep.subr.bf16.mxu0 0
    %529 = vmatpush1.bf16.msra.mxu0 %v516
    %530 = vmatprep.subr.bf16.mxu0 0
    %531 = vmatpush1.bf16.msra.mxu0 %v515
    %532 = vmatprep.subr.bf16.mxu0 0
    %533 = vmatpush1.bf16.msra.mxu0 %v514
    %534 = vmatprep.subr.bf16.mxu0 0
    %535 = vmatpush1.bf16.msra.mxu0 %v513
    %536 = vmatprep.subr.bf16.mxu0 0
    %537 = vmatpush1.bf16.msra.mxu0 %v512
    %538 = vmatprep.subr.bf16.mxu0 0
    %539 = vmatpush1.bf16.msra.mxu0 %v511
    %540 = vmatprep.subr.bf16.mxu0 0
    %541 = vmatpush1.bf16.msra.mxu0 %v510
    %542 = vmatprep.subr.bf16.mxu0 0
    %543 = vmatpush2.bf16.msra.mxu0 0
    %544 = vmatprep.subr.bf16.mxu0 0
    %545 = vmatpush2.bf16.msra.mxu0 0
    %546 = vmatprep.subr.bf16.mxu0 0
    %547 = vmatpush2.bf16.msra.mxu0 0
    %548 = vmatprep.subr.bf16.mxu0 0
    %549 = vmatpush2.bf16.msra.mxu0 0
    %550 = vmatprep.subr.bf16.mxu0 0
    %551 = vmatpush2.bf16.msra.mxu0 0
    %552 = vmatprep.subr.bf16.mxu0 0
    %553 = vmatpush2.bf16.msra.mxu0 0
    %554 = vmatprep.subr.bf16.mxu0 0
    %555 = vmatpush2.bf16.msra.mxu0 0
    %556 = vmatprep.subr.bf16.mxu0 0
    %557 = vmatpush2.bf16.msra.mxu0 0
    %558 = vmatprep.mubr.bf16.mxu0 0
    %559 = vmatmul.mubr.bf16.gmra.mxu0 %v454
    %v560 = vpop.f32.mrf.mxu0
    %v561 = vadd.f32 %v476, %v560
    %v562 = vpop.f32.mrf.mxu0
    %v563 = vpop.f32.mrf.mxu0
    %v564 = vpop.f32.mrf.mxu0
    %565 = vdwg.mxu0
    %vm566 = vcmask 64512
    %567 = vst.msk [vmem:[#allocation7] sm:$0xff] %vm566, %v561
    // Predicated region
    $region46: #{tpu_custom_call.1} parent=1 // pred_check
      _
    $region47: #{tpu_custom_call.1} parent=1 // pred_check_branch
      %569 = sbr.rel (0) target = $region49
    $region48: #{tpu_custom_call.1} parent=1 // pred_region
      %s571 = ssub.s32 128, 128
      %572 = vsyncadd [#allocation4], %s571
      %s574 = sshll.u32 [#allocation7], 4
      %s575 = int_to_ptr.vmem [resolvable:$true] %s574
      %577 = dma.vmem_to_hbm [thread:$0]  %s575, 128, %s9, [#allocation4]
    $region49: #{tpu_custom_call.1} parent=1 // pred_fallthru
      _
    // Predicated region
    $region50: #{tpu_custom_call.1} parent=1 // pred_check
      _
    $region51: #{tpu_custom_call.1} parent=1 // pred_check_branch
      %579 = sbr.rel (0) target = $region53
    $region52: #{tpu_custom_call.1} parent=1 // pred_region
      %580 = dma.done [#allocation4], 128
    $region53: #{tpu_custom_call.1} parent=1 // pred_fallthru
      _
    %581 = vsyncpa [#allocation3], 1
    %582 = vsyncpa [#allocation6], 1
    %583 = vsyncpa [#allocation4], 1

</llo_original>
